<compile_context>
chip_gen: v5e
topology: v5e:2x2
jax: 0.10.0
libtpu: 0.0.40
codegen_flags: <defaults>
</compile_context>

<pallas_src>
import jax
import jax.numpy as jnp
from jax import lax
from jax.experimental import pallas as pl
from jax.experimental.pallas import tpu as pltpu


def _round_up(x, m):
    return -(-x // m) * m


def _round_down(x, m):
    return (x // m) * m


# --------------------------------------------------------------------------
# Kernels
# --------------------------------------------------------------------------
def _row_bias_kernel(e_ref, bias_ref):
    # bias[n, 0] = logsumexp_m E[n, m] == rowmax + log(sum(exp(E - rowmax))).
    # Assumes the full (N_pad, M) matrix fits in VMEM (guarded in the wrapper).
    e = e_ref[...]                                                    # (N_pad, M)
    m = jnp.max(e, axis=1, keepdims=True)                             # (N_pad, 1)
    bias_ref[...] = (
        m + jnp.log(jnp.sum(jnp.exp(e - m), axis=1, keepdims=True))
    ).astype(bias_ref.dtype)


def _gather_kernel(x_ref, e_ref, bias_ref, o_ref):
    # x_ref   : (1, T_tile)      i32  observation indices for this tile (streamed)
    # e_ref   : (N_pad, M)       f32  unnormalized emission matrix (VMEM-resident)
    # bias_ref: (N_pad, 1)       f32  per-row logsumexp (VMEM-resident)
    # o_ref   : (N_pad, T_tile)  f32  output block (lane-dense on T)
    e = e_ref[...]
    m = e.shape[1]
    t_tile = o_ref.shape[1]

    # NOTE: out-of-range indices are clamped to valid columns (PyTorch advanced
    # indexing would raise instead); padded tail columns gather column 0 and
    # are sliced off by the wrapper.
    idx = jnp.clip(x_ref[...], 0, m - 1)                              # (1, T_tile)

    # onehot[s, t] = (s == idx[t]); iota runs over sublanes, the index row
    # broadcasts across lanes -> no cross-lane shuffles.  0/1 is exact.
    rows = lax.broadcasted_iota(jnp.int32, (m, t_tile), 0)            # (M, T_tile)
    onehot = (rows == idx).astype(e.dtype)

    # (N_pad, M) @ (M, T_tile): layout-natural MXU contraction (no implicit
    # operand transpose).  Precision.HIGHEST keeps the selected f32 values
    # un-rounded, so this equals a true column gather of E.
    gathered = lax.dot_general(
        e, onehot,
        dimension_numbers=(((1,), (0,)), ((), ())),
        preferred_element_type=jnp.float32,
        precision=lax.Precision.HIGHEST,
    )
    # Fused log-softmax: log_softmax(E)[n, x_t] == E[n, x_t] - logsumexp_m E[n, :].
    o_ref[...] = (gathered - bias_ref[...]).astype(o_ref.dtype)


# --------------------------------------------------------------------------
# Tiling / compiler-parameter heuristics
# --------------------------------------------------------------------------
def _choose_t_tile(T, M, *, max_tile=1024, onehot_budget_bytes=4 << 20):
    """Adaptive lane-dense T tile.

    Large enough (>=128, up to 1024) to amortize the ~0.35us per-grid-step
    overhead, small enough that the in-kernel (M, t_tile) f32 one-hot stays
    within a few MiB of VMEM, and split so moderate T still yields >=2 grid
    steps for the 'parallel' axis to shard across v7x's two TensorCores.
    """
    t_pad_min = max(128, _round_up(max(T, 1), 128))
    onehot_cap = max(128, _round_down(onehot_budget_bytes // (4 * max(M, 1)), 128))
    tile = min(max_tile, t_pad_min, onehot_cap)
    if tile == t_pad_min and t_pad_min >= 256:
        # A single-step grid would serialize onto one core; split in two.
        tile = max(128, _round_up(t_pad_min // 2, 128))
    return tile


def _pick_vmem_limit():
    """Generation-aware scoped-VMEM limit: ~3/4 of physical, capped at 96 MiB.

    v5e/v6e (128 MiB physical) -> 96 MiB; v7x (64 MiB/TC) -> 48 MiB.
    Falls back to a conservative 48 MiB if the hardware query is unavailable.
    """
    try:
        physical = pltpu.get_tpu_info().vmem_capacity_bytes
    except Exception:
        physical = 64 * 1024 * 1024
    return int(min(96 * 1024 * 1024, max(32 * 1024 * 1024, (physical * 3) // 4)))


def _build_gather_call(n_pad, M, t_pad, t_tile, vmem_limit, single_buffer_resident):
    if single_buffer_resident:
        # Constant-index resident blocks never change across the grid, so
        # double-buffering them only doubles VMEM; request a single buffer.
        def resident(shape):
            return pl.BlockSpec(shape, lambda t: (0, 0),
                                pipeline_mode=pl.Buffered(1))
    else:
        def resident(shape):
            return pl.BlockSpec(shape, lambda t: (0, 0))

    return pl.pallas_call(
        _gather_kernel,
        out_shape=jax.ShapeDtypeStruct((n_pad, t_pad), jnp.float32),
        grid=(t_pad // t_tile,),
        in_specs=[
            pl.BlockSpec((1, t_tile), lambda t: (0, t)),   # indices: streamed per tile
            resident((n_pad, M)),                          # E: VMEM-resident
            resident((n_pad, 1)),                          # bias: VMEM-resident
        ],
        out_specs=pl.BlockSpec((n_pad, t_tile), lambda t: (0, t)),
        compiler_params=pltpu.CompilerParams(
            dimension_semantics=("parallel",),             # megacore sharding on v7x
            vmem_limit_bytes=vmem_limit,                   # generation aware
        ),
    )


# --------------------------------------------------------------------------
# Forward wrapper
# --------------------------------------------------------------------------
def emission_forward(unnormalized_emission_matrix, x_t, *, t_tile=None,
                     transpose_output=True):
    """Pallas equivalent of EmissionModel.forward.

    Returns (T, N) like the PyTorch module.  Callers that can consume the
    lane-dense (N, T) layout directly may pass transpose_output=False to skip
    the extra HBM read+write transpose pass.
    """
    N, M = unnormalized_emission_matrix.shape
    T = int(x_t.shape[0])

    n_pad = _round_up(N, 8)                  # full-sublane LHS rows / output stores
    if t_tile is None:
        t_tile = _choose_t_tile(T, M)
    t_pad = _round_up(max(T, 1), t_tile)

    vmem_limit = _pick_vmem_limit()
    resident_bytes = n_pad * M * 4
    if resident_bytes > vmem_limit // 2:
        # TODO(synk): M-tiled online-logsumexp + DMA column gather for huge N*M.
        raise ValueError(
            f"(N={N}, M={M}) emission matrix (~{resident_bytes} bytes f32) does not "
            f"fit the scoped VMEM budget ({vmem_limit} bytes); an M-tiled online-"
            "softmax variant is required.")

    e_pad = jnp.zeros((n_pad, M), jnp.float32)
    e_pad = e_pad.at[:N, :].set(unnormalized_emission_matrix.astype(jnp.float32))

    # ---- Phase 1: per-row logsumexp bias (N_pad, 1); tiny, pure VMEM. ----
    bias = pl.pallas_call(
        _row_bias_kernel,
        out_shape=jax.ShapeDtypeStruct((n_pad, 1), jnp.float32),
        in_specs=[pl.BlockSpec(memory_space=pltpu.MemorySpace.VMEM)],
        out_specs=pl.BlockSpec(memory_space=pltpu.MemorySpace.VMEM),
    )(e_pad)

    # ---- Phase 2: pipelined one-hot gather over T with fused bias subtract. ----
    # Pad T up to the tile so every store is a full, unmasked 128-lane vst;
    # padded columns gather index 0 and are sliced off below.
    x2d = jnp.zeros((1, t_pad), dtype=jnp.int32).at[0, :T].set(x_t.astype(jnp.int32))

    try:
        out_nt = _build_gather_call(n_pad, M, t_pad, t_tile, vmem_limit,
                                    single_buffer_resident=True)(x2d, e_pad, bias)
    except Exception:
        # Older jax: pl.Buffered(1) not supported on top-level BlockSpecs;
        # fall back to default (double-buffered) residents.
        out_nt = _build_gather_call(n_pad, M, t_pad, t_tile, vmem_limit,
                                    single_buffer_resident=False)(x2d, e_pad, bias)

    out_nt = out_nt[:N, :T]                  # drop sublane / lane padding
    return out_nt.T if transpose_output else out_nt


def emission_forward_ref(unnormalized_emission_matrix, x_t):
    """Pure-JAX reference mirroring the PyTorch forward."""
    logp = jax.nn.log_softmax(unnormalized_emission_matrix, axis=1)   # (N, M)
    return logp[:, x_t].T                                             # (T, N)


if __name__ == "__main__":
    # Module shape params (synthetic, deterministic init — no checkpoint load).
    N = 4    # number of hidden states
    M = 16   # number of observation symbols
    T = 8    # observation sequence length

    key = jax.random.PRNGKey(0)
    k_emit, k_obs = jax.random.split(key)

    unnormalized_emission_matrix = jax.random.normal(k_emit, (N, M), dtype=jnp.float32)
    x_t = jax.random.randint(k_obs, (T,), 0, M, dtype=jnp.int32)

    out = emission_forward(unnormalized_emission_matrix, x_t)
    out = jax.block_until_ready(out)

    ref = emission_forward_ref(unnormalized_emission_matrix, x_t)
    assert out.shape == (T, N), out.shape
    assert jnp.allclose(out, ref, atol=1e-5, rtol=1e-5), "mismatch vs reference"

    print("KERNEL_OK")
</pallas_src>

<mosaic_0001>
module attributes {stable_mosaic.version = 11 : i64} {
  func.func @_row_bias_kernel(%arg0: memref<8x16xf32, #tpu.memory_space<vmem>>, %arg1: memref<8x1xf32, #tpu.memory_space<vmem>>) attributes {dimension_semantics = [], scalar_prefetch = 0 : i64, scratch_operands = 0 : i64, tpu.core_type = #tpu.core_type<tc>} {
    %c0 = arith.constant 0 : index
    %c0_0 = arith.constant 0 : index
    %0 = vector.load %arg0[%c0, %c0_0] : memref<8x16xf32, #tpu.memory_space<vmem>>, vector<8x16xf32>
    %cst = arith.constant dense<0xFF800000> : vector<8xf32>
    %1 = vector.multi_reduction <maximumf>, %0, %cst [1] : vector<8x16xf32> to vector<8xf32>
    %2 = vector.shape_cast %1 : vector<8xf32> to vector<8x1xf32>
    %3 = vector.broadcast %2 : vector<8x1xf32> to vector<8x16xf32>
    %4 = arith.subf %0, %3 : vector<8x16xf32>
    %5 = math.exp %4 : vector<8x16xf32>
    %cst_1 = arith.constant dense<0.000000e+00> : vector<8xf32>
    %6 = vector.multi_reduction <add>, %5, %cst_1 [1] : vector<8x16xf32> to vector<8xf32>
    %7 = vector.shape_cast %6 : vector<8xf32> to vector<8x1xf32>
    %8 = math.log %7 : vector<8x1xf32>
    %9 = arith.addf %2, %8 : vector<8x1xf32>
    %c0_2 = arith.constant 0 : index
    %c0_3 = arith.constant 0 : index
    %10 = vector.load %arg1[%c0_2, %c0_3] : memref<8x1xf32, #tpu.memory_space<vmem>>, vector<8x1xf32>
    tpu.vector_store %arg1[%c0_2, %c0_3], %9 {strides = array<i32>} : memref<8x1xf32, #tpu.memory_space<vmem>>, vector<8x1xf32>,
    return
  }
}

</mosaic_0001>

<llo_original>
// kernel: tpu_custom_call.1
$region0: #{tpu_custom_call.1}
  #allocation0 [shape = 'u32[]', space=smem, size = 0x4, offset = 0x4, fixed_abs, tag = 'smem constant byte address 0x4 - core index']
  #allocation1 [shape = 'u32[72,128]{1,0:T(1,128)}', space=vmem, size = 0x9000, scoped, tag = 'internal scratch']
  %s0 = inlined_call_operand.hbm [shape: f32[8,16], index: 0, kind: input, shape index: {}]
  %s1 = inlined_call_operand.vmem [shape: f32[8,1], index: 1, kind: output, shape index: {}]
  %s2 = sld [smem:[#allocation0]]
  $region18: #{tpu_custom_call.1} parent=0
    _
  %s4 = ssub.s32 1, %s2
  %s5 = scalar_select 0, %s4, %s2
  $region1: #{tpu_custom_call.1} parent=0
    #allocation2 [shape = 'u8[4096]{0}', space=vmem, size = 0x1000, scoped, tag = 'input window, operand 0, single buffered']
    #allocation3 [shape = 's32[1]{0}', space=sflag, size = 0x4, scoped, tag = 'scoped memory for tpu_custom_call.1']
    %6 = vsyncpa [#allocation3], 0
    // Predicated region
    $region2: #{tpu_custom_call.1} parent=1 // pred_check
      _
    $region3: #{tpu_custom_call.1} parent=1 // pred_check_branch
      %8 = sbr.rel (0) target = $region5
    $region4: #{tpu_custom_call.1} parent=1 // pred_region
      %10 = vsyncadd [#allocation3], 0
      %s12 = sshll.u32 %s0, 4
      %s13 = int_to_ptr.hbm [resolvable:$true] %s12
      %s14 = sshll.u32 [#allocation2], 4
      %s15 = int_to_ptr.vmem [resolvable:$true] %s14
      %17 = dma.hbm_to_vmem [thread:$0]  %s13, 128, %s15, [#allocation3]
    $region5: #{tpu_custom_call.1} parent=1 // pred_fallthru
      _
    // Predicated region
    $region6: #{tpu_custom_call.1} parent=1 // pred_check
      _
    $region7: #{tpu_custom_call.1} parent=1 // pred_check_branch
      %19 = sbr.rel (0) target = $region9
    $region8: #{tpu_custom_call.1} parent=1 // pred_region
      %21 = dma.done [#allocation3], 128
    $region9: #{tpu_custom_call.1} parent=1 // pred_fallthru
      _
    %v22 = vld [vmem:[#allocation2] sm:$0xff]
    %vm23 = vcmask 130048
    %v24 = vsel %vm23, %v22, -inf
    %25 = vmax.xlane.f32.xlu0 %v24
    %v26 = vpop.xlane.xlu0 %25
    %v27 = vsub.f32 %v22, %v26
    %v28 = vmul.f32 %v27, 1.442695
    %v29 = vpow.pop %v28
    %v30 = vsel %vm23, %v29, 0.0
    %31 = vadd.xlane.f32.xlu0 %v30
    %v32 = vpop.xlane.xlu0 %31
    %v33 = vlog2.pop %v32
    %v34 = vmul.f32 %v33, 0.6931472
    %v35 = vadd.f32 %v26, %v34
    %vm36 = vcmask 7168
    %37 = vst.msk [vmem:[%s1] sm:$0xff] %vm36, %v35
    // Predicated region
    $region10: #{tpu_custom_call.1} parent=1 // pred_check
      _
    $region11: #{tpu_custom_call.1} parent=1 // pred_check_branch
      %39 = sbr.rel (0) target = $region13
    $region12: #{tpu_custom_call.1} parent=1 // pred_region
      _
    $region13: #{tpu_custom_call.1} parent=1 // pred_fallthru
      _
    // Predicated region
    $region14: #{tpu_custom_call.1} parent=1 // pred_check
      _
    $region15: #{tpu_custom_call.1} parent=1 // pred_check_branch
      %41 = sbr.rel (0) target = $region17
    $region16: #{tpu_custom_call.1} parent=1 // pred_region
      _
    $region17: #{tpu_custom_call.1} parent=1 // pred_fallthru
      _
    %42 = vsyncpa [#allocation3], 1

</llo_original>
